<compile_context>
chip_gen: v6e
topology: v6e:2x2x1
jax: 0.10.0
libtpu: 0.0.40
codegen_flags: <defaults>
</compile_context>

<pallas_src>
import jax
import jax.numpy as jnp
from jax.experimental import pallas as pl
from jax.experimental.pallas import tpu as pltpu

LANES = 128
DEFAULT_TILE_ROWS = 1024  # 1024 * 128 * 4B = 512 KiB per f32 input buffer


def _mse_partial_kernel(x_ref, y_ref, out_ref):
    """Accumulate per-lane sums of squared differences into out_ref (1, 128) f32."""
    i = pl.program_id(0)

    @pl.when(i == 0)
    def _():
        out_ref[...] = jnp.zeros_like(out_ref)

    diff = x_ref[...].astype(jnp.float32) - y_ref[...].astype(jnp.float32)
    sq = diff * diff                                     # (tile_rows, 128), VPU
    out_ref[...] += jnp.sum(sq, axis=0, keepdims=True)   # cross-sublane reduce (XLU)


def mse_loss(y_pred: jax.Array, y_true: jax.Array, reduction: str = "mean",
             tile_rows: int = DEFAULT_TILE_ROWS) -> jax.Array:
    """MSE loss over all elements, matching torch.nn.MSELoss(reduction=...)."""
    assert y_pred.shape == y_true.shape, (y_pred.shape, y_true.shape)
    if reduction not in ("mean", "sum"):
        # TODO(synk): reduction='none' (elementwise output) not implemented in the
        # Pallas kernel; it is a trivial elementwise op best left to XLA.
        raise NotImplementedError(f"reduction={reduction!r} not supported")

    n_elems = y_pred.size
    xp = y_pred.reshape(-1)
    yt = y_true.reshape(-1)

    # Lane-dense layout: (rows, 128), rows tiled along a 1-D reduction grid.
    rows = pl.cdiv(n_elems, LANES)
    tr = min(tile_rows, ((rows + 7) // 8) * 8)       # multiple of 8 (sublane tiling)
    rows_padded = ((rows + tr - 1) // tr) * tr
    padded_len = rows_padded * LANES
    pad = padded_len - n_elems
    if pad:
        # Zero padding on both inputs -> padded diffs are 0 and add nothing.
        xp = jnp.pad(xp, (0, pad))
        yt = jnp.pad(yt, (0, pad))
    xp = xp.reshape(rows_padded, LANES)
    yt = yt.reshape(rows_padded, LANES)

    grid = (rows_padded // tr,)

    lane_sums = pl.pallas_call(
        _mse_partial_kernel,
        out_shape=jax.ShapeDtypeStruct((1, LANES), jnp.float32),
        grid=grid,
        in_specs=[
            pl.BlockSpec((tr, LANES), lambda i: (i, 0)),
            pl.BlockSpec((tr, LANES), lambda i: (i, 0)),
        ],
        out_specs=pl.BlockSpec((1, LANES), lambda i: (0, 0)),
        compiler_params=pltpu.CompilerParams(
            dimension_semantics=("arbitrary",)),
    )(xp, yt)

    total = jnp.sum(lane_sums)                        # tiny 128-lane reduce in XLA
    if reduction == "sum":
        return total
    return total / n_elems


def _mse_ref(y_pred, y_true, reduction="mean"):
    sq = (y_pred.astype(jnp.float32) - y_true.astype(jnp.float32)) ** 2
    return jnp.sum(sq) if reduction == "sum" else jnp.mean(sq)


if __name__ == "__main__":
    # Small shape consistent with a generic MSELoss forward: (batch, C, H, W).
    B, C, H, W = 2, 4, 16, 16
    key = jax.random.PRNGKey(0)
    k1, k2 = jax.random.split(key)
    y_pred = jax.random.normal(k1, (B, C, H, W), dtype=jnp.float32)
    y_true = jax.random.normal(k2, (B, C, H, W), dtype=jnp.float32)

    # Default tiling (single grid step at this size).
    loss = mse_loss(y_pred, y_true, reduction="mean")
    jax.block_until_ready(loss)
    ref = _mse_ref(y_pred, y_true, reduction="mean")
    assert jnp.allclose(loss, ref, rtol=1e-5, atol=1e-6), (loss, ref)

    # Force multiple grid steps to exercise the resident-output accumulation path.
    loss_multi = mse_loss(y_pred, y_true, reduction="mean", tile_rows=8)
    jax.block_until_ready(loss_multi)
    assert jnp.allclose(loss_multi, ref, rtol=1e-5, atol=1e-6), (loss_multi, ref)

    # 'sum' reduction sanity check.
    loss_sum = mse_loss(y_pred, y_true, reduction="sum")
    jax.block_until_ready(loss_sum)
    ref_sum = _mse_ref(y_pred, y_true, reduction="sum")
    assert jnp.allclose(loss_sum, ref_sum, rtol=1e-5, atol=1e-4), (loss_sum, ref_sum)

    print("KERNEL_OK")
</pallas_src>

<mosaic_0001>
module attributes {stable_mosaic.version = 11 : i64} {
  func.func @_mse_partial_kernel(%arg0: i32, %arg1: memref<16x128xf32, #tpu.memory_space<vmem>>, %arg2: memref<16x128xf32, #tpu.memory_space<vmem>>, %arg3: memref<1x128xf32, #tpu.memory_space<vmem>>) attributes {dimension_semantics = [#tpu.dimension_semantics<arbitrary>], iteration_bounds = array<i64: 1>, scalar_prefetch = 0 : i64, scratch_operands = 0 : i64, tpu.core_type = #tpu.core_type<tc>, window_params = [{transform_indices = @transform_0, window_bounds = array<i64: 16, 128>}, {transform_indices = @transform_1, window_bounds = array<i64: 16, 128>}, {pipeline_mode = #tpu.pipeline_mode<synchronous>, transform_indices = @transform_2, window_bounds = array<i64: 1, 128>}]} {
    %c0_i32 = arith.constant 0 : i32
    %0 = arith.cmpi eq, %arg0, %c0_i32 : i32
    %1 = arith.extui %0 : i1 to i32
    %c0_i32_0 = arith.constant 0 : i32
    %2 = arith.cmpi ne, %1, %c0_i32_0 : i32
    scf.if %2 {
      %cst_8 = arith.constant 0.000000e+00 : f32
      %12 = vector.broadcast %cst_8 : f32 to vector<1x128xf32>
      %c0_9 = arith.constant 0 : index
      %c0_10 = arith.constant 0 : index
      %13 = vector.load %arg3[%c0_9, %c0_10] : memref<1x128xf32, #tpu.memory_space<vmem>>, vector<1x128xf32>
      tpu.vector_store %arg3[%c0_9, %c0_10], %12 {strides = array<i32>} : memref<1x128xf32, #tpu.memory_space<vmem>>, vector<1x128xf32>,
    } else {
    }
    %c0 = arith.constant 0 : index
    %c0_1 = arith.constant 0 : index
    %3 = vector.load %arg1[%c0, %c0_1] : memref<16x128xf32, #tpu.memory_space<vmem>>, vector<16x128xf32>
    %c0_2 = arith.constant 0 : index
    %c0_3 = arith.constant 0 : index
    %4 = vector.load %arg2[%c0_2, %c0_3] : memref<16x128xf32, #tpu.memory_space<vmem>>, vector<16x128xf32>
    %5 = arith.subf %3, %4 : vector<16x128xf32>
    %6 = arith.mulf %5, %5 : vector<16x128xf32>
    %c0_4 = arith.constant 0 : index
    %c0_5 = arith.constant 0 : index
    %7 = vector.load %arg3[%c0_4, %c0_5] : memref<1x128xf32, #tpu.memory_space<vmem>>, vector<1x128xf32>
    %cst = arith.constant dense<0.000000e+00> : vector<128xf32>
    %8 = vector.multi_reduction <add>, %6, %cst [0] : vector<16x128xf32> to vector<128xf32>
    %9 = vector.shape_cast %8 : vector<128xf32> to vector<1x128xf32>
    %10 = arith.addf %7, %9 : vector<1x128xf32>
    %c0_6 = arith.constant 0 : index
    %c0_7 = arith.constant 0 : index
    %11 = vector.load %arg3[%c0_6, %c0_7] : memref<1x128xf32, #tpu.memory_space<vmem>>, vector<1x128xf32>
    tpu.vector_store %arg3[%c0_6, %c0_7], %10 {strides = array<i32>} : memref<1x128xf32, #tpu.memory_space<vmem>>, vector<1x128xf32>,
    return
  }
  func.func @transform_0(%arg0: i32) -> (i32, i32) {
    %c0_i32 = arith.constant 0 : i32
    %c0_i32_0 = arith.constant 0 : i32
    return %arg0, %c0_i32 : i32, i32
  }
  func.func @transform_1(%arg0: i32) -> (i32, i32) {
    %c0_i32 = arith.constant 0 : i32
    %c0_i32_0 = arith.constant 0 : i32
    return %arg0, %c0_i32 : i32, i32
  }
  func.func @transform_2(%arg0: i32) -> (i32, i32) {
    %c0_i32 = arith.constant 0 : i32
    %c0_i32_0 = arith.constant 0 : i32
    %c0_i32_1 = arith.constant 0 : i32
    return %c0_i32, %c0_i32_0 : i32, i32
  }
}

</mosaic_0001>

<llo_original>
// kernel: tpu_custom_call.1
$region0: #{tpu_custom_call.1}
  #allocation0 [shape = 'u32[]', space=smem, size = 0x4, offset = 0x4, fixed_abs, tag = 'smem constant byte address 0x4 - core index']
  #allocation1 [shape = 'u32[144,128]{1,0:T(1,128)}', space=vmem, size = 0x12000, scoped, tag = 'internal scratch']
  %s0 = inlined_call_operand.hbm [shape: f32[16,128], index: 0, kind: input, shape index: {}]
  %s1 = inlined_call_operand.hbm [shape: f32[16,128], index: 1, kind: input, shape index: {}]
  %s2 = inlined_call_operand.hbm [shape: f32[1,128], index: 2, kind: output, shape index: {}]
  %s3 = sld [smem:[#allocation0]]
  $region30: #{tpu_custom_call.1} parent=0
    _
  %s5 = ssub.s32 1, %s3
  %s6 = scalar_select 0, %s5, %s3
  $region1: #{tpu_custom_call.1} parent=0
    #allocation2 [shape = 'u8[8192]{0}', space=vmem, size = 0x2000, scoped, tag = 'input window, operand 0, single buffered']
    #allocation3 [shape = 's32[1]{0}', space=sflag, size = 0x4, scoped, tag = 'scoped memory for tpu_custom_call.1']
    #allocation4 [shape = 's32[1]{0}', space=sflag, size = 0x4, scoped, tag = 'scoped memory for tpu_custom_call.1']
    #allocation5 [shape = 'u8[8192]{0}', space=vmem, size = 0x2000, scoped, tag = 'input window, operand 1, single buffered']
    #allocation6 [shape = 's32[1]{0}', space=sflag, size = 0x4, scoped, tag = 'scoped memory for tpu_custom_call.1']
    #allocation7 [shape = 'u8[512]{0}', space=vmem, size = 0x400, scoped, tag = 'output window, operand 0, single buffered']
    %7 = vsyncpa [#allocation3], 0
    %8 = vsyncpa [#allocation6], 0
    %9 = vsyncpa [#allocation4], 0
    // Predicated region
    $region2: #{tpu_custom_call.1} parent=1 // pred_check
      _
    $region3: #{tpu_custom_call.1} parent=1 // pred_check_branch
      %11 = sbr.rel (0) target = $region5
    $region4: #{tpu_custom_call.1} parent=1 // pred_region
      %s13 = ssub.s32 256, 256
      %14 = vsyncadd [#allocation3], %s13
      %s15 = sshll.u32 [#allocation2], 4
      %s16 = int_to_ptr.vmem [resolvable:$true] %s15
      %21 = dma.hbm_to_vmem [thread:$0]  %s0, 256, %s16, [#allocation3], 128, 128, 8
    $region5: #{tpu_custom_call.1} parent=1 // pred_fallthru
      _
    // Predicated region
    $region6: #{tpu_custom_call.1} parent=1 // pred_check
      _
    $region7: #{tpu_custom_call.1} parent=1 // pred_check_branch
      %23 = sbr.rel (0) target = $region9
    $region8: #{tpu_custom_call.1} parent=1 // pred_region
      %s25 = ssub.s32 256, 256
      %26 = vsyncadd [#allocation6], %s25
      %s27 = sshll.u32 [#allocation5], 4
      %s28 = int_to_ptr.vmem [resolvable:$true] %s27
      %33 = dma.hbm_to_vmem [thread:$0]  %s1, 256, %s28, [#allocation6], 128, 128, 8
    $region9: #{tpu_custom_call.1} parent=1 // pred_fallthru
      _
    // Predicated region
    $region10: #{tpu_custom_call.1} parent=1 // pred_check
      _
    $region11: #{tpu_custom_call.1} parent=1 // pred_check_branch
      %35 = sbr.rel (0) target = $region13
    $region12: #{tpu_custom_call.1} parent=1 // pred_region
      %36 = dma.done [#allocation3], 256
    $region13: #{tpu_custom_call.1} parent=1 // pred_fallthru
      _
    // Predicated region
    $region14: #{tpu_custom_call.1} parent=1 // pred_check
      _
    $region15: #{tpu_custom_call.1} parent=1 // pred_check_branch
      %38 = sbr.rel (0) target = $region17
    $region16: #{tpu_custom_call.1} parent=1 // pred_region
      %39 = dma.done [#allocation6], 256
    $region17: #{tpu_custom_call.1} parent=1 // pred_fallthru
      _
    %p40 = scmp.eq.s32.totalorder 0, 0
    // Predicated region
    $region18: #{tpu_custom_call.1} parent=1 // pred_check
      %p41 = pneg %p40
    $region19: #{tpu_custom_call.1} parent=1 // pred_check_branch
      %43 = sbr.rel (%p41) target = $region21
    $region20: #{tpu_custom_call.1} parent=1 // pred_region
      %44 = vst [vmem:[#allocation7] sm:$0x1] 0.0
    $region21: #{tpu_custom_call.1} parent=1 // pred_fallthru
      _
    %v45 = vld [vmem:[#allocation2] sm:$0xff]
    %v46 = vld [vmem:[#allocation2 + $0x8] sm:$0xff]
    %v47 = vld [vmem:[#allocation5] sm:$0xff]
    %v48 = vld [vmem:[#allocation5 + $0x8] sm:$0xff]
    %v49 = vsub.f32 %v45, %v47
    %v50 = vsub.f32 %v46, %v48
    %v51 = vmul.f32 %v49, %v49
    %v52 = vmul.f32 %v50, %v50
    %v53 = vld [vmem:[#allocation7] sm:$0x1]
    %v54 = vadd.f32 %v51, %v52
    %v55 = vrot.slane %v54, 4
    %v56 = vadd.f32 %v54, %v55
    %v57 = vrot.slane %v56, 2
    %v58 = vadd.f32 %v56, %v57
    %v59 = vrot.slane %v58, 1
    %v60 = vadd.f32 %v58, %v59
    %v61 = vadd.f32 %v53, %v60
    %62 = vst [vmem:[#allocation7] sm:$0x1] %v61
    // Predicated region
    $region22: #{tpu_custom_call.1} parent=1 // pred_check
      _
    $region23: #{tpu_custom_call.1} parent=1 // pred_check_branch
      %64 = sbr.rel (0) target = $region25
    $region24: #{tpu_custom_call.1} parent=1 // pred_region
      %s66 = ssub.s32 16, 16
      %67 = vsyncadd [#allocation4], %s66
      %s69 = sshll.u32 [#allocation7], 4
      %s70 = int_to_ptr.vmem [resolvable:$true] %s69
      %72 = dma.vmem_to_hbm [thread:$0]  %s70, 16, %s2, [#allocation4]
    $region25: #{tpu_custom_call.1} parent=1 // pred_fallthru
      _
    // Predicated region
    $region26: #{tpu_custom_call.1} parent=1 // pred_check
      _
    $region27: #{tpu_custom_call.1} parent=1 // pred_check_branch
      %74 = sbr.rel (0) target = $region29
    $region28: #{tpu_custom_call.1} parent=1 // pred_region
      %75 = dma.done [#allocation4], 16
    $region29: #{tpu_custom_call.1} parent=1 // pred_fallthru
      _
    %76 = vsyncpa [#allocation3], 1
    %77 = vsyncpa [#allocation6], 1
    %78 = vsyncpa [#allocation4], 1

</llo_original>
